<compile_context>
chip_gen: v7x
topology: tpu7x:2x2x1
jax: 0.10.0
libtpu: 0.0.40
codegen_flags: <defaults>
</compile_context>

<pallas_src>
import functools

import jax
import jax.numpy as jnp
import numpy as np
from jax import lax
from jax.experimental import pallas as pl
from jax.experimental.pallas import tpu as pltpu


def _leaky(x, slope=0.1):
    return jnp.where(x >= 0, x, slope * x)


def _round_up(v, m):
    return (v + m - 1) // m * m


def convblock_kernel(x_ref, wconv_ref, bconv_ref, wlin_t_ref, blin_ref,
                     gamma_ref, beta_ref, out_ref, *,
                     kernel_size, n_valid_cols, eps, compute_dtype):
    """One grid step handles a tile of Ct output channels end-to-end.

    x_ref      : (N, Cin, L_pad)    zero-padded input (full array, lane-padded)
    wconv_ref  : (Ct, K*Cin)        conv weight tile, im2col layout (k-major)
    bconv_ref  : (Ct, 1)
    wlin_t_ref : (Lc_pad, Lp_pad)   pre-transposed Linear weight, padding folded
                                    in, zero-padded to the lane tile
    blin_ref   : (1, Lp_pad)
    gamma_ref  : (Ct, 1)            BN affine weight
    beta_ref   : (Ct, 1)            BN affine bias
    out_ref    : (N, Ct, Lp_pad)
    """
    N = x_ref.shape[0]
    K = kernel_size
    Ct = out_ref.shape[1]
    Lp_pad = out_ref.shape[2]
    Lc_pad = wlin_t_ref.shape[0]
    cd = compute_dtype

    wc = wconv_ref[...].astype(cd)              # (Ct, K*Cin)
    bconv = bconv_ref[...]                      # (Ct, 1) f32
    wlin_t = wlin_t_ref[...].astype(cd)         # (Lc_pad, Lp_pad)
    blin = blin_ref[...]                        # (1, Lp_pad) f32

    # ---- Conv1d (valid, stride 1): single im2col matmul for the whole batch.
    #      im2col row index is k*Cin + ci  <->  x[n, ci, l + k]; the N samples
    #      are batched along the lane axis (lane-aligned: Lc_pad % 128 == 0). ----
    xcols = []
    for n in range(N):                          # N is tiny; static unroll
        xn = x_ref[n].astype(cd)                # (Cin, L_pad)
        xcols.append(jnp.concatenate([xn[:, k:k + Lc_pad] for k in range(K)],
                                     axis=0))   # (K*Cin, Lc_pad)
    xcol_all = jnp.concatenate(xcols, axis=1)   # (K*Cin, N*Lc_pad)
    y_all = _leaky(jnp.dot(wc, xcol_all, preferred_element_type=jnp.float32)
                   + bconv)                     # (Ct, N*Lc_pad) f32
    # Re-stack batch along rows for the Linear (lane-aligned static slices).
    y = jnp.concatenate([y_all[:, n * Lc_pad:(n + 1) * Lc_pad] for n in range(N)],
                        axis=0).astype(cd)      # (N*Ct, Lc_pad)

    # ---- Linear over the length dim (zero 'same'-padding already folded into
    #      wlin_t), batched over N as a single MXU matmul ----
    z = _leaky(jnp.dot(y, wlin_t, preferred_element_type=jnp.float32) + blin)

    # Park the pre-BN activations in the VMEM-resident output block so they do
    # not have to stay register-resident across the reduction below.
    for n in range(N):
        out_ref[n] = z[n * Ct:(n + 1) * Ct, :].astype(out_ref.dtype)

    # ---- BatchNorm1d, training-mode batch statistics over (N, L) per channel.
    #      Columns >= n_valid_cols are lane padding and are masked out. ----
    col = lax.broadcasted_iota(jnp.int32, (Ct, Lp_pad), 1)
    valid = col < n_valid_cols
    cnt = float(N * n_valid_cols)

    s = jnp.zeros((Ct, 1), jnp.float32)
    for n in range(N):
        s = s + jnp.sum(jnp.where(valid, out_ref[n], 0.0), axis=1, keepdims=True)
    mean = s / cnt

    sq = jnp.zeros((Ct, 1), jnp.float32)
    for n in range(N):
        d = jnp.where(valid, out_ref[n] - mean, 0.0)
        sq = sq + jnp.sum(d * d, axis=1, keepdims=True)
    var = sq / cnt
    inv = lax.rsqrt(var + eps)

    scale = gamma_ref[...] * inv                # (Ct, 1)
    shift = beta_ref[...] - scale * mean        # (Ct, 1)
    for n in range(N):
        out_ref[n] = (out_ref[n] * scale + shift).astype(out_ref.dtype)


def conv_block_forward(x, params, *, kernel_size, pad=False, eps=1e-5,
                       cout_tile=None, compute_dtype=jnp.float32):
    """Pallas implementation of ConvBlock.forward (BatchNorm in training mode).

    Set compute_dtype=jnp.bfloat16 on v6e/v7x for ~2x MXU throughput (BN and
    activations stay f32); the f32 default matches the PyTorch module closely.
    """
    wconv, bconv, wlin, blin, gamma, beta = params
    N, Cin, L = x.shape
    Cout = wconv.shape[0]
    K = kernel_size
    Lconv = L - K + 1
    Lp = L if pad else Lconv

    # Fold the constant zero padding into the Linear weight: padded columns of
    # the conv output are zero, so  y_pad @ W.T == y @ W[:, left:left+Lconv].T
    if pad:
        left = K // 2
        right = K // 2 - 1
        if left + Lconv + right != Lp:
            # Same constraint as the original PyTorch module: its F.pad +
            # Linear shapes only line up for even kernel sizes.
            raise ValueError("pad=True requires an even kernel_size")
        wlin_used = wlin[:, left:left + Lconv]          # (Lp, Lconv)
    else:
        wlin_used = wlin                                # (Lp == Lconv, Lconv)
    wlin_t = wlin_used.T                                # (Lconv, Lp)

    # Lane-dense (multiple-of-128) padding of every length-like dim.
    Lc_pad = _round_up(Lconv, 128)
    Lp_pad = _round_up(Lp, 128)
    L_pad = Lc_pad + K - 1                              # every shifted slice fits

    x_p = jnp.pad(x, ((0, 0), (0, 0), (0, L_pad - L)))
    wlin_t_p = jnp.pad(wlin_t, ((0, Lc_pad - Lconv), (0, Lp_pad - Lp)))
    blin_p = jnp.pad(blin.reshape(1, Lp), ((0, 0), (0, Lp_pad - Lp)))

    # Conv weight in im2col layout: column index = k*Cin + ci (host-side, free).
    wconv_im2col = jnp.transpose(wconv, (0, 2, 1)).reshape(Cout, K * Cin)

    # Channel tiling: BN is per-channel, so channel tiles are independent.
    if cout_tile is None:
        cout_tile = Cout if Cout <= 256 else 256
    if Cout % cout_tile != 0 or (cout_tile != Cout and cout_tile % 8 != 0):
        cout_tile = Cout
    grid = (Cout // cout_tile,)

    # Rough per-step VMEM need; only raise the scoped limit when required and
    # keep headroom for v7x's 64 MiB physical VMEM.
    vmem_est = 4 * (2 * (x_p.size + wlin_t_p.size + blin_p.size
                         + cout_tile * (K * Cin + 3))
                    + 2 * N * cout_tile * Lp_pad
                    + 4 * N * cout_tile * max(Lc_pad, Lp_pad))
    vmem_limit = None
    if vmem_est > 24 * 2**20:
        vmem_limit = int(min(vmem_est * 3 // 2, 48 * 2**20))

    kern = functools.partial(convblock_kernel, kernel_size=K, n_valid_cols=Lp,
                             eps=eps, compute_dtype=compute_dtype)

    out_padded = pl.pallas_call(
        kern,
        out_shape=jax.ShapeDtypeStruct((N, Cout, Lp_pad), jnp.float32),
        grid=grid,
        in_specs=[
            pl.BlockSpec((N, Cin, L_pad), lambda j: (0, 0, 0)),      # x
            pl.BlockSpec((cout_tile, K * Cin), lambda j: (j, 0)),    # conv W (im2col)
            pl.BlockSpec((cout_tile, 1), lambda j: (j, 0)),          # conv b
            pl.BlockSpec((Lc_pad, Lp_pad), lambda j: (0, 0)),        # linear W^T
            pl.BlockSpec((1, Lp_pad), lambda j: (0, 0)),             # linear b
            pl.BlockSpec((cout_tile, 1), lambda j: (j, 0)),          # BN gamma
            pl.BlockSpec((cout_tile, 1), lambda j: (j, 0)),          # BN beta
        ],
        out_specs=pl.BlockSpec((N, cout_tile, Lp_pad), lambda j: (0, j, 0)),
        compiler_params=pltpu.CompilerParams(
            dimension_semantics=("parallel",),
            vmem_limit_bytes=vmem_limit),
    )(x_p, wconv_im2col, bconv.reshape(Cout, 1), wlin_t_p, blin_p,
      gamma.reshape(Cout, 1), beta.reshape(Cout, 1))

    return out_padded[:, :, :Lp]


def conv_block_reference(x, params, *, kernel_size, pad=False, eps=1e-5):
    """Pure-JAX reference mirroring the PyTorch forward (training-mode BN)."""
    wconv, bconv, wlin, blin, gamma, beta = params
    y = lax.conv_general_dilated(x, wconv, window_strides=(1,), padding='VALID',
                                 dimension_numbers=('NCH', 'OIH', 'NCH'))
    y = _leaky(y + bconv[None, :, None])
    if pad:
        left = kernel_size // 2
        right = kernel_size // 2 - 1
        y = jnp.pad(y, ((0, 0), (0, 0), (left, right)))
    z = jnp.einsum('ncl,ml->ncm', y, wlin) + blin[None, None, :]
    z = _leaky(z)
    mean = jnp.mean(z, axis=(0, 2), keepdims=True)
    var = jnp.mean((z - mean) ** 2, axis=(0, 2), keepdims=True)
    return gamma[None, :, None] * (z - mean) / jnp.sqrt(var + eps) + beta[None, :, None]


def init_params(key, in_channels, out_channels, kernel_size, lin_size):
    """Deterministic synthetic parameter init (shapes match the PyTorch module)."""
    ks = jax.random.split(key, 4)
    conv_bound = 1.0 / np.sqrt(in_channels * kernel_size)
    lin_bound = 1.0 / np.sqrt(lin_size)
    wconv = jax.random.uniform(ks[0], (out_channels, in_channels, kernel_size),
                               jnp.float32, -conv_bound, conv_bound)
    bconv = jax.random.uniform(ks[1], (out_channels,), jnp.float32,
                               -conv_bound, conv_bound)
    wlin = jax.random.uniform(ks[2], (lin_size, lin_size), jnp.float32,
                              -lin_bound, lin_bound)
    blin = jax.random.uniform(ks[3], (lin_size,), jnp.float32,
                              -lin_bound, lin_bound)
    gamma = jnp.ones((out_channels,), jnp.float32)     # BN affine weight
    beta = jnp.zeros((out_channels,), jnp.float32)     # BN affine bias
    return wconv, bconv, wlin, blin, gamma, beta
    # NOTE: self.do (Dropout) is never called in ConvBlock.forward, so it is omitted.


if __name__ == "__main__":
    key = jax.random.PRNGKey(0)

    # Case 1: ConvBlock(input_size=16, in_channels=4, out_channels=8,
    #                   kernel_size=3, pad=False), batch N=2.
    N, Cin, Cout, L, K = 2, 4, 8, 16, 3
    lin_size = L - K + 1
    kx, kp, key = jax.random.split(key, 3)
    x = jax.random.normal(kx, (N, Cin, L), jnp.float32)
    params = init_params(kp, Cin, Cout, K, lin_size)
    out = jax.block_until_ready(conv_block_forward(x, params, kernel_size=K, pad=False))
    ref = conv_block_reference(x, params, kernel_size=K, pad=False)
    np.testing.assert_allclose(np.asarray(out), np.asarray(ref), rtol=1e-4, atol=1e-4)

    # Case 2: pad=True with even kernel_size (the only case where the original
    # module's F.pad + Linear shapes line up): ConvBlock(16, 4, 8, 4, pad=True).
    N2, Cin2, Cout2, L2, K2 = 2, 4, 8, 16, 4
    kx2, kp2, key = jax.random.split(key, 3)
    x2 = jax.random.normal(kx2, (N2, Cin2, L2), jnp.float32)
    params2 = init_params(kp2, Cin2, Cout2, K2, L2)
    out2 = jax.block_until_ready(conv_block_forward(x2, params2, kernel_size=K2, pad=True))
    ref2 = conv_block_reference(x2, params2, kernel_size=K2, pad=True)
    np.testing.assert_allclose(np.asarray(out2), np.asarray(ref2), rtol=1e-4, atol=1e-4)

    print("KERNEL_OK")
</pallas_src>

<mosaic_0001>
module attributes {stable_mosaic.version = 11 : i64} {
  func.func @convblock_kernel(%arg0: i32, %arg1: memref<2x4x130xf32, #tpu.memory_space<vmem>>, %arg2: memref<8x12xf32, #tpu.memory_space<vmem>>, %arg3: memref<8x1xf32, #tpu.memory_space<vmem>>, %arg4: memref<128x128xf32, #tpu.memory_space<vmem>>, %arg5: memref<1x128xf32, #tpu.memory_space<vmem>>, %arg6: memref<8x1xf32, #tpu.memory_space<vmem>>, %arg7: memref<8x1xf32, #tpu.memory_space<vmem>>, %arg8: memref<2x8x128xf32, #tpu.memory_space<vmem>>) attributes {dimension_semantics = [#tpu.dimension_semantics<parallel>], iteration_bounds = array<i64: 1>, scalar_prefetch = 0 : i64, scratch_operands = 0 : i64, tpu.core_type = #tpu.core_type<tc>, window_params = [{pipeline_mode = #tpu.pipeline_mode<synchronous>, transform_indices = @transform_0, window_bounds = array<i64: 2, 4, 130>}, {transform_indices = @transform_1, window_bounds = array<i64: 8, 12>}, {transform_indices = @transform_2, window_bounds = array<i64: 8, 1>}, {pipeline_mode = #tpu.pipeline_mode<synchronous>, transform_indices = @transform_3, window_bounds = array<i64: 128, 128>}, {pipeline_mode = #tpu.pipeline_mode<synchronous>, transform_indices = @transform_4, window_bounds = array<i64: 1, 128>}, {transform_indices = @transform_5, window_bounds = array<i64: 8, 1>}, {transform_indices = @transform_6, window_bounds = array<i64: 8, 1>}, {transform_indices = @transform_7, window_bounds = array<i64: 2, 8, 128>}]} {
    %c0 = arith.constant 0 : index
    %c0_0 = arith.constant 0 : index
    %0 = vector.load %arg2[%c0, %c0_0] : memref<8x12xf32, #tpu.memory_space<vmem>>, vector<8x12xf32>
    %c0_1 = arith.constant 0 : index
    %c0_2 = arith.constant 0 : index
    %1 = vector.load %arg3[%c0_1, %c0_2] : memref<8x1xf32, #tpu.memory_space<vmem>>, vector<8x1xf32>
    %c0_3 = arith.constant 0 : index
    %c0_4 = arith.constant 0 : index
    %2 = vector.load %arg4[%c0_3, %c0_4] : memref<128x128xf32, #tpu.memory_space<vmem>>, vector<128x128xf32>
    %c0_5 = arith.constant 0 : index
    %c0_6 = arith.constant 0 : index
    %3 = vector.load %arg5[%c0_5, %c0_6] : memref<1x128xf32, #tpu.memory_space<vmem>>, vector<1x128xf32>
    %c0_7 = arith.constant 0 : index
    %c0_8 = arith.constant 0 : index
    %c0_9 = arith.constant 0 : index
    %4 = vector.load %arg1[%c0_7, %c0_8, %c0_9] : memref<2x4x130xf32, #tpu.memory_space<vmem>>, vector<1x4x130xf32>
    %5 = vector.shape_cast %4 : vector<1x4x130xf32> to vector<4x130xf32>
    %6 = vector.extract_strided_slice %5 {offsets = [0, 0], sizes = [4, 128], strides = [1, 1]} : vector<4x130xf32> to vector<4x128xf32>
    %7 = vector.extract_strided_slice %5 {offsets = [0, 1], sizes = [4, 128], strides = [1, 1]} : vector<4x130xf32> to vector<4x128xf32>
    %8 = vector.extract_strided_slice %5 {offsets = [0, 2], sizes = [4, 128], strides = [1, 1]} : vector<4x130xf32> to vector<4x128xf32>
    %9 = tpu.concatenate %6, %7, %8 in 0 : vector<4x128xf32>, vector<4x128xf32>, vector<4x128xf32> -> vector<12x128xf32>
    %c1 = arith.constant 1 : index
    %c0_10 = arith.constant 0 : index
    %c0_11 = arith.constant 0 : index
    %10 = vector.load %arg1[%c1, %c0_10, %c0_11] : memref<2x4x130xf32, #tpu.memory_space<vmem>>, vector<1x4x130xf32>
    %11 = vector.shape_cast %10 : vector<1x4x130xf32> to vector<4x130xf32>
    %12 = vector.extract_strided_slice %11 {offsets = [0, 0], sizes = [4, 128], strides = [1, 1]} : vector<4x130xf32> to vector<4x128xf32>
    %13 = vector.extract_strided_slice %11 {offsets = [0, 1], sizes = [4, 128], strides = [1, 1]} : vector<4x130xf32> to vector<4x128xf32>
    %14 = vector.extract_strided_slice %11 {offsets = [0, 2], sizes = [4, 128], strides = [1, 1]} : vector<4x130xf32> to vector<4x128xf32>
    %15 = tpu.concatenate %12, %13, %14 in 0 : vector<4x128xf32>, vector<4x128xf32>, vector<4x128xf32> -> vector<12x128xf32>
    %16 = tpu.concatenate %9, %15 in 1 : vector<12x128xf32>, vector<12x128xf32> -> vector<12x256xf32>
    %cst = arith.constant dense<0.000000e+00> : vector<8x256xf32>
    %17 = tpu.matmul %0, %16, %cst {dimension_numbers = #tpu.dot_dimension_numbers<[1], [0], [0], [1], [0, 0, 1, 1], [], []>} : vector<8x12xf32>, vector<12x256xf32>, vector<8x256xf32> -> vector<8x256xf32>
    %18 = vector.broadcast %1 : vector<8x1xf32> to vector<8x256xf32>
    %19 = arith.addf %17, %18 : vector<8x256xf32>
    %cst_12 = arith.constant 0.000000e+00 : f32
    %20 = vector.broadcast %cst_12 : f32 to vector<8x256xf32>
    %21 = arith.cmpf oge, %19, %20 : vector<8x256xf32>
    %cst_13 = arith.constant 1.000000e-01 : f32
    %22 = vector.broadcast %cst_13 : f32 to vector<8x256xf32>
    %23 = arith.mulf %22, %19 : vector<8x256xf32>
    %24 = arith.select %21, %19, %23 : vector<8x256xi1>, vector<8x256xf32>
    %25 = vector.extract_strided_slice %24 {offsets = [0, 0], sizes = [8, 128], strides = [1, 1]} : vector<8x256xf32> to vector<8x128xf32>
    %26 = vector.extract_strided_slice %24 {offsets = [0, 128], sizes = [8, 128], strides = [1, 1]} : vector<8x256xf32> to vector<8x128xf32>
    %27 = tpu.concatenate %25, %26 in 0 : vector<8x128xf32>, vector<8x128xf32> -> vector<16x128xf32>
    %cst_14 = arith.constant dense<0.000000e+00> : vector<16x128xf32>
    %28 = tpu.matmul %27, %2, %cst_14 {dimension_numbers = #tpu.dot_dimension_numbers<[1], [0], [0], [1], [0, 0, 1, 1], [], []>} : vector<16x128xf32>, vector<128x128xf32>, vector<16x128xf32> -> vector<16x128xf32>
    %29 = vector.broadcast %3 : vector<1x128xf32> to vector<16x128xf32>
    %30 = arith.addf %28, %29 : vector<16x128xf32>
    %cst_15 = arith.constant 0.000000e+00 : f32
    %31 = vector.broadcast %cst_15 : f32 to vector<16x128xf32>
    %32 = arith.cmpf oge, %30, %31 : vector<16x128xf32>
    %cst_16 = arith.constant 1.000000e-01 : f32
    %33 = vector.broadcast %cst_16 : f32 to vector<16x128xf32>
    %34 = arith.mulf %33, %30 : vector<16x128xf32>
    %35 = arith.select %32, %30, %34 : vector<16x128xi1>, vector<16x128xf32>
    %36 = vector.extract_strided_slice %35 {offsets = [0, 0], sizes = [8, 128], strides = [1, 1]} : vector<16x128xf32> to vector<8x128xf32>
    %c0_17 = arith.constant 0 : index
    %c0_18 = arith.constant 0 : index
    %c0_19 = arith.constant 0 : index
    %37 = vector.load %arg8[%c0_17, %c0_18, %c0_19] : memref<2x8x128xf32, #tpu.memory_space<vmem>>, vector<1x8x128xf32>
    %38 = vector.shape_cast %37 : vector<1x8x128xf32> to vector<8x128xf32>
    %39 = vector.shape_cast %36 : vector<8x128xf32> to vector<1x8x128xf32>
    tpu.vector_store %arg8[%c0_17, %c0_18, %c0_19], %39 {strides = array<i32>} : memref<2x8x128xf32, #tpu.memory_space<vmem>>, vector<1x8x128xf32>,
    %40 = vector.extract_strided_slice %35 {offsets = [8, 0], sizes = [8, 128], strides = [1, 1]} : vector<16x128xf32> to vector<8x128xf32>
    %c1_20 = arith.constant 1 : index
    %c0_21 = arith.constant 0 : index
    %c0_22 = arith.constant 0 : index
    %41 = vector.load %arg8[%c1_20, %c0_21, %c0_22] : memref<2x8x128xf32, #tpu.memory_space<vmem>>, vector<1x8x128xf32>
    %42 = vector.shape_cast %41 : vector<1x8x128xf32> to vector<8x128xf32>
    %43 = vector.shape_cast %40 : vector<8x128xf32> to vector<1x8x128xf32>
    tpu.vector_store %arg8[%c1_20, %c0_21, %c0_22], %43 {strides = array<i32>} : memref<2x8x128xf32, #tpu.memory_space<vmem>>, vector<1x8x128xf32>,
    %44 = tpu.iota {dimensions = array<i32: 1>} : vector<8x128xi32>
    %c14_i32 = arith.constant 14 : i32
    %45 = vector.broadcast %c14_i32 : i32 to vector<8x128xi32>
    %46 = arith.cmpi slt, %44, %45 : vector<8x128xi32>
    %cst_23 = arith.constant 0.000000e+00 : f32
    %47 = vector.broadcast %cst_23 : f32 to vector<8x1xf32>
    %c0_24 = arith.constant 0 : index
    %c0_25 = arith.constant 0 : index
    %c0_26 = arith.constant 0 : index
    %48 = vector.load %arg8[%c0_24, %c0_25, %c0_26] : memref<2x8x128xf32, #tpu.memory_space<vmem>>, vector<1x8x128xf32>
    %49 = vector.shape_cast %48 : vector<1x8x128xf32> to vector<8x128xf32>
    %cst_27 = arith.constant 0.000000e+00 : f32
    %50 = vector.broadcast %cst_27 : f32 to vector<8x128xf32>
    %51 = arith.select %46, %49, %50 : vector<8x128xi1>, vector<8x128xf32>
    %cst_28 = arith.constant dense<0.000000e+00> : vector<8xf32>
    %52 = vector.multi_reduction <add>, %51, %cst_28 [1] : vector<8x128xf32> to vector<8xf32>
    %53 = vector.shape_cast %52 : vector<8xf32> to vector<8x1xf32>
    %54 = arith.addf %47, %53 : vector<8x1xf32>
    %c1_29 = arith.constant 1 : index
    %c0_30 = arith.constant 0 : index
    %c0_31 = arith.constant 0 : index
    %55 = vector.load %arg8[%c1_29, %c0_30, %c0_31] : memref<2x8x128xf32, #tpu.memory_space<vmem>>, vector<1x8x128xf32>
    %56 = vector.shape_cast %55 : vector<1x8x128xf32> to vector<8x128xf32>
    %cst_32 = arith.constant 0.000000e+00 : f32
    %57 = vector.broadcast %cst_32 : f32 to vector<8x128xf32>
    %58 = arith.select %46, %56, %57 : vector<8x128xi1>, vector<8x128xf32>
    %cst_33 = arith.constant dense<0.000000e+00> : vector<8xf32>
    %59 = vector.multi_reduction <add>, %58, %cst_33 [1] : vector<8x128xf32> to vector<8xf32>
    %60 = vector.shape_cast %59 : vector<8xf32> to vector<8x1xf32>
    %61 = arith.addf %54, %60 : vector<8x1xf32>
    %cst_34 = arith.constant 2.800000e+01 : f32
    %62 = vector.broadcast %cst_34 : f32 to vector<8x1xf32>
    %63 = arith.divf %61, %62 : vector<8x1xf32>
    %cst_35 = arith.constant 0.000000e+00 : f32
    %64 = vector.broadcast %cst_35 : f32 to vector<8x1xf32>
    %c0_36 = arith.constant 0 : index
    %c0_37 = arith.constant 0 : index
    %c0_38 = arith.constant 0 : index
    %65 = vector.load %arg8[%c0_36, %c0_37, %c0_38] : memref<2x8x128xf32, #tpu.memory_space<vmem>>, vector<1x8x128xf32>
    %66 = vector.shape_cast %65 : vector<1x8x128xf32> to vector<8x128xf32>
    %67 = vector.broadcast %63 : vector<8x1xf32> to vector<8x128xf32>
    %68 = arith.subf %66, %67 : vector<8x128xf32>
    %cst_39 = arith.constant 0.000000e+00 : f32
    %69 = vector.broadcast %cst_39 : f32 to vector<8x128xf32>
    %70 = arith.select %46, %68, %69 : vector<8x128xi1>, vector<8x128xf32>
    %71 = arith.mulf %70, %70 : vector<8x128xf32>
    %cst_40 = arith.constant dense<0.000000e+00> : vector<8xf32>
    %72 = vector.multi_reduction <add>, %71, %cst_40 [1] : vector<8x128xf32> to vector<8xf32>
    %73 = vector.shape_cast %72 : vector<8xf32> to vector<8x1xf32>
    %74 = arith.addf %64, %73 : vector<8x1xf32>
    %c1_41 = arith.constant 1 : index
    %c0_42 = arith.constant 0 : index
    %c0_43 = arith.constant 0 : index
    %75 = vector.load %arg8[%c1_41, %c0_42, %c0_43] : memref<2x8x128xf32, #tpu.memory_space<vmem>>, vector<1x8x128xf32>
    %76 = vector.shape_cast %75 : vector<1x8x128xf32> to vector<8x128xf32>
    %77 = vector.broadcast %63 : vector<8x1xf32> to vector<8x128xf32>
    %78 = arith.subf %76, %77 : vector<8x128xf32>
    %cst_44 = arith.constant 0.000000e+00 : f32
    %79 = vector.broadcast %cst_44 : f32 to vector<8x128xf32>
    %80 = arith.select %46, %78, %79 : vector<8x128xi1>, vector<8x128xf32>
    %81 = arith.mulf %80, %80 : vector<8x128xf32>
    %cst_45 = arith.constant dense<0.000000e+00> : vector<8xf32>
    %82 = vector.multi_reduction <add>, %81, %cst_45 [1] : vector<8x128xf32> to vector<8xf32>
    %83 = vector.shape_cast %82 : vector<8xf32> to vector<8x1xf32>
    %84 = arith.addf %74, %83 : vector<8x1xf32>
    %cst_46 = arith.constant 2.800000e+01 : f32
    %85 = vector.broadcast %cst_46 : f32 to vector<8x1xf32>
    %86 = arith.divf %84, %85 : vector<8x1xf32>
    %cst_47 = arith.constant 9.99999974E-6 : f32
    %87 = vector.broadcast %cst_47 : f32 to vector<8x1xf32>
    %88 = arith.addf %86, %87 : vector<8x1xf32>
    %89 = math.rsqrt %88 : vector<8x1xf32>
    %c0_48 = arith.constant 0 : index
    %c0_49 = arith.constant 0 : index
    %90 = vector.load %arg6[%c0_48, %c0_49] : memref<8x1xf32, #tpu.memory_space<vmem>>, vector<8x1xf32>
    %91 = arith.mulf %90, %89 : vector<8x1xf32>
    %c0_50 = arith.constant 0 : index
    %c0_51 = arith.constant 0 : index
    %92 = vector.load %arg7[%c0_50, %c0_51] : memref<8x1xf32, #tpu.memory_space<vmem>>, vector<8x1xf32>
    %93 = arith.mulf %91, %63 : vector<8x1xf32>
    %94 = arith.subf %92, %93 : vector<8x1xf32>
    %c0_52 = arith.constant 0 : index
    %c0_53 = arith.constant 0 : index
    %c0_54 = arith.constant 0 : index
    %95 = vector.load %arg8[%c0_52, %c0_53, %c0_54] : memref<2x8x128xf32, #tpu.memory_space<vmem>>, vector<1x8x128xf32>
    %96 = vector.shape_cast %95 : vector<1x8x128xf32> to vector<8x128xf32>
    %97 = vector.broadcast %91 : vector<8x1xf32> to vector<8x128xf32>
    %98 = arith.mulf %96, %97 : vector<8x128xf32>
    %99 = vector.broadcast %94 : vector<8x1xf32> to vector<8x128xf32>
    %100 = arith.addf %98, %99 : vector<8x128xf32>
    %c0_55 = arith.constant 0 : index
    %c0_56 = arith.constant 0 : index
    %c0_57 = arith.constant 0 : index
    %101 = vector.load %arg8[%c0_55, %c0_56, %c0_57] : memref<2x8x128xf32, #tpu.memory_space<vmem>>, vector<1x8x128xf32>
    %102 = vector.shape_cast %101 : vector<1x8x128xf32> to vector<8x128xf32>
    %103 = vector.shape_cast %100 : vector<8x128xf32> to vector<1x8x128xf32>
    tpu.vector_store %arg8[%c0_55, %c0_56, %c0_57], %103 {strides = array<i32>} : memref<2x8x128xf32, #tpu.memory_space<vmem>>, vector<1x8x128xf32>,
    %c1_58 = arith.constant 1 : index
    %c0_59 = arith.constant 0 : index
    %c0_60 = arith.constant 0 : index
    %104 = vector.load %arg8[%c1_58, %c0_59, %c0_60] : memref<2x8x128xf32, #tpu.memory_space<vmem>>, vector<1x8x128xf32>
    %105 = vector.shape_cast %104 : vector<1x8x128xf32> to vector<8x128xf32>
    %106 = vector.broadcast %91 : vector<8x1xf32> to vector<8x128xf32>
    %107 = arith.mulf %105, %106 : vector<8x128xf32>
    %108 = vector.broadcast %94 : vector<8x1xf32> to vector<8x128xf32>
    %109 = arith.addf %107, %108 : vector<8x128xf32>
    %c1_61 = arith.constant 1 : index
    %c0_62 = arith.constant 0 : index
    %c0_63 = arith.constant 0 : index
    %110 = vector.load %arg8[%c1_61, %c0_62, %c0_63] : memref<2x8x128xf32, #tpu.memory_space<vmem>>, vector<1x8x128xf32>
    %111 = vector.shape_cast %110 : vector<1x8x128xf32> to vector<8x128xf32>
    %112 = vector.shape_cast %109 : vector<8x128xf32> to vector<1x8x128xf32>
    tpu.vector_store %arg8[%c1_61, %c0_62, %c0_63], %112 {strides = array<i32>} : memref<2x8x128xf32, #tpu.memory_space<vmem>>, vector<1x8x128xf32>,
    return
  }
  func.func @transform_0(%arg0: i32) -> (i32, i32, i32) {
    %c0_i32 = arith.constant 0 : i32
    %c0_i32_0 = arith.constant 0 : i32
    %c0_i32_1 = arith.constant 0 : i32
    %c0_i32_2 = arith.constant 0 : i32
    return %c0_i32, %c0_i32_0, %c0_i32_1 : i32, i32, i32
  }
  func.func @transform_1(%arg0: i32) -> (i32, i32) {
    %c0_i32 = arith.constant 0 : i32
    %c0_i32_0 = arith.constant 0 : i32
    return %arg0, %c0_i32 : i32, i32
  }
  func.func @transform_2(%arg0: i32) -> (i32, i32) {
    %c0_i32 = arith.constant 0 : i32
    %c0_i32_0 = arith.constant 0 : i32
    return %arg0, %c0_i32 : i32, i32
  }
  func.func @transform_3(%arg0: i32) -> (i32, i32) {
    %c0_i32 = arith.constant 0 : i32
    %c0_i32_0 = arith.constant 0 : i32
    %c0_i32_1 = arith.constant 0 : i32
    return %c0_i32, %c0_i32_0 : i32, i32
  }
  func.func @transform_4(%arg0: i32) -> (i32, i32) {
    %c0_i32 = arith.constant 0 : i32
    %c0_i32_0 = arith.constant 0 : i32
    %c0_i32_1 = arith.constant 0 : i32
    return %c0_i32, %c0_i32_0 : i32, i32
  }
  func.func @transform_5(%arg0: i32) -> (i32, i32) {
    %c0_i32 = arith.constant 0 : i32
    %c0_i32_0 = arith.constant 0 : i32
    return %arg0, %c0_i32 : i32, i32
  }
  func.func @transform_6(%arg0: i32) -> (i32, i32) {
    %c0_i32 = arith.constant 0 : i32
    %c0_i32_0 = arith.constant 0 : i32
    return %arg0, %c0_i32 : i32, i32
  }
  func.func @transform_7(%arg0: i32) -> (i32, i32, i32) {
    %c0_i32 = arith.constant 0 : i32
    %c0_i32_0 = arith.constant 0 : i32
    %c0_i32_1 = arith.constant 0 : i32
    return %c0_i32, %arg0, %c0_i32_0 : i32, i32, i32
  }
}

</mosaic_0001>

<llo_original>
// kernel: tpu_custom_call.1
$region0: #{tpu_custom_call.1}
  #allocation0 [shape = 'u32[]', space=smem, size = 0x4, offset = 0x4, fixed_abs, tag = 'smem constant byte address 0x4 - core index']
  #allocation1 [shape = 'u32[144,128]{1,0:T(1,128)}', space=vmem, size = 0x12000, scoped, tag = 'internal scratch']
  %s0 = inlined_call_operand.vmem [shape: f32[2,4,130], index: 0, kind: input, shape index: {}]
  %s1 = inlined_call_operand.vmem [shape: f32[8,12], index: 1, kind: input, shape index: {}]
  %s2 = inlined_call_operand.vmem [shape: f32[8,1], index: 2, kind: input, shape index: {}]
  %s3 = inlined_call_operand.hbm [shape: f32[128,128], index: 3, kind: input, shape index: {}]
  %s4 = inlined_call_operand.vmem [shape: f32[1,128], index: 4, kind: input, shape index: {}]
  %s5 = inlined_call_operand.vmem [shape: f32[8,1], index: 5, kind: input, shape index: {}]
  %s6 = inlined_call_operand.vmem [shape: f32[8,1], index: 6, kind: input, shape index: {}]
  %s7 = inlined_call_operand.hbm [shape: f32[2,8,128], index: 7, kind: output, shape index: {}]
  %s8 = sld [smem:[#allocation0]]
  $region42: #{tpu_custom_call.1} parent=0
    _
  %s10 = ssub.s32 1, %s8
  %s11 = scalar_select 0, %s10, %s8
  $region1: #{tpu_custom_call.1} parent=0
    #allocation2 [shape = 'u8[65536]{0}', space=vmem, size = 0x10000, scoped, tag = 'input window, operand 3, single buffered']
    #allocation3 [shape = 's32[1]{0}', space=sflag, size = 0x4, scoped, tag = 'scoped memory for tpu_custom_call.1']
    #allocation4 [shape = 's32[1]{0}', space=sflag, size = 0x4, scoped, tag = 'scoped memory for tpu_custom_call.1']
    #allocation5 [shape = 'u8[8192]{0}', space=vmem, size = 0x2000, scoped, tag = 'output window, operand 0, single buffered']
    %12 = vsyncpa [#allocation3], 0
    %13 = vsyncpa [#allocation4], 0
    // Predicated region
    $region2: #{tpu_custom_call.1} parent=1 // pred_check
      _
    $region3: #{tpu_custom_call.1} parent=1 // pred_check_branch
      %15 = sbr.rel (0) target = $region5
    $region4: #{tpu_custom_call.1} parent=1 // pred_region
      _
    $region5: #{tpu_custom_call.1} parent=1 // pred_fallthru
      _
    // Predicated region
    $region6: #{tpu_custom_call.1} parent=1 // pred_check
      _
    $region7: #{tpu_custom_call.1} parent=1 // pred_check_branch
      %17 = sbr.rel (0) target = $region9
    $region8: #{tpu_custom_call.1} parent=1 // pred_region
      _
    $region9: #{tpu_custom_call.1} parent=1 // pred_fallthru
      _
    // Predicated region
    $region10: #{tpu_custom_call.1} parent=1 // pred_check
      _
    $region11: #{tpu_custom_call.1} parent=1 // pred_check_branch
      %19 = sbr.rel (0) target = $region13
    $region12: #{tpu_custom_call.1} parent=1 // pred_region
      _
    $region13: #{tpu_custom_call.1} parent=1 // pred_fallthru
      _
    // Predicated region
    $region14: #{tpu_custom_call.1} parent=1 // pred_check
      _
    $region15: #{tpu_custom_call.1} parent=1 // pred_check_branch
      %21 = sbr.rel (0) target = $region17
    $region16: #{tpu_custom_call.1} parent=1 // pred_region
      %s23 = ssub.s32 2048, 2048
      %24 = vsyncadd [#allocation3], %s23
      %s25 = sshll.u32 [#allocation2], 4
      %s26 = int_to_ptr.vmem [resolvable:$true] %s25
      %31 = dma.hbm_to_vmem [thread:$0]  %s3, 2048, %s26, [#allocation3], 128, 128, 8
    $region17: #{tpu_custom_call.1} parent=1 // pred_fallthru
      _
    // Predicated region
    $region18: #{tpu_custom_call.1} parent=1 // pred_check
      _
    $region19: #{tpu_custom_call.1} parent=1 // pred_check_branch
      %33 = sbr.rel (0) target = $region21
    $region20: #{tpu_custom_call.1} parent=1 // pred_region
      _
    $region21: #{tpu_custom_call.1} parent=1 // pred_fallthru
      _
    // Predicated region
    $region22: #{tpu_custom_call.1} parent=1 // pred_check
      _
    $region23: #{tpu_custom_call.1} parent=1 // pred_check_branch
      %35 = sbr.rel (0) target = $region25
    $region24: #{tpu_custom_call.1} parent=1 // pred_region
      _
    $region25: #{tpu_custom_call.1} parent=1 // pred_fallthru
      _
    // Predicated region
    $region26: #{tpu_custom_call.1} parent=1 // pred_check
      _
    $region27: #{tpu_custom_call.1} parent=1 // pred_check_branch
      %37 = sbr.rel (0) target = $region29
    $region28: #{tpu_custom_call.1} parent=1 // pred_region
      _
    $region29: #{tpu_custom_call.1} parent=1 // pred_fallthru
      _
    // Predicated region
    $region30: #{tpu_custom_call.1} parent=1 // pred_check
      _
    $region31: #{tpu_custom_call.1} parent=1 // pred_check_branch
      %39 = sbr.rel (0) target = $region33
    $region32: #{tpu_custom_call.1} parent=1 // pred_region
      %40 = dma.done [#allocation3], 2048
    $region33: #{tpu_custom_call.1} parent=1 // pred_fallthru
      _
    %v41 = vld [vmem:[%s1] sm:$0xff]
    %v42 = vld [vmem:[%s2] sm:$0xff]
    %v43 = vld [vmem:[#allocation2] sm:$0xff]
    %v44 = vld [vmem:[#allocation2 + $0x8] sm:$0xff]
    %v45 = vld [vmem:[#allocation2 + $0x10] sm:$0xff]
    %v46 = vld [vmem:[#allocation2 + $0x18] sm:$0xff]
    %v47 = vld [vmem:[#allocation2 + $0x20] sm:$0xff]
    %v48 = vld [vmem:[#allocation2 + $0x28] sm:$0xff]
    %v49 = vld [vmem:[#allocation2 + $0x30] sm:$0xff]
    %v50 = vld [vmem:[#allocation2 + $0x38] sm:$0xff]
    %v51 = vld [vmem:[#allocation2 + $0x40] sm:$0xff]
    %v52 = vld [vmem:[#allocation2 + $0x48] sm:$0xff]
    %v53 = vld [vmem:[#allocation2 + $0x50] sm:$0xff]
    %v54 = vld [vmem:[#allocation2 + $0x58] sm:$0xff]
    %v55 = vld [vmem:[#allocation2 + $0x60] sm:$0xff]
    %v56 = vld [vmem:[#allocation2 + $0x68] sm:$0xff]
    %v57 = vld [vmem:[#allocation2 + $0x70] sm:$0xff]
    %v58 = vld [vmem:[#allocation2 + $0x78] sm:$0xff]
    %v59 = vld [vmem:[%s4] sm:$0x1]
    %v60 = vld [vmem:[%s0] sm:$0xff]
    %v62 = vcombine.low %v60, %v60
    %63 = vrot.lane.b32.xlu0 %v62, 127
    %v64 = vpop.permute.xlu0 %63
    %65 = vrot.lane.b32.xlu0 %v60, 127
    %v66 = vpop.permute.xlu0 %65
    %vm67 = vcmask 1039360
    %v68 = vsel %vm67, %v64, %v66
    %v70 = vcombine.high %v60, %v60
    %71 = vrot.lane.b32.xlu0 %v60, 126
    %v72 = vpop.permute.xlu0 %71
    %73 = vrot.lane.b32.xlu0 %v70, 126
    %v74 = vpop.permute.xlu0 %73
    %vm75 = vcmask 1031168
    %v76 = vsel %vm75, %v72, %v74
    %vm77 = vcmask 1043456
    %v78 = vsel %vm77, %v60, %v68
    %s79 = scalar_lea.vmem %s0, 8
    %v80 = vld [vmem:[%s79] sm:$0xff]
    %v82 = vcombine.low %v80, %v80
    %83 = vrot.lane.b32.xlu0 %v82, 127
    %v84 = vpop.permute.xlu0 %83
    %85 = vrot.lane.b32.xlu0 %v80, 127
    %v86 = vpop.permute.xlu0 %85
    %v87 = vsel %vm67, %v84, %v86
    %v89 = vcombine.high %v80, %v80
    %90 = vrot.lane.b32.xlu0 %v80, 126
    %v91 = vpop.permute.xlu0 %90
    %92 = vrot.lane.b32.xlu0 %v89, 126
    %v93 = vpop.permute.xlu0 %92
    %v94 = vsel %vm75, %v91, %v93
    %v95 = vsel %vm77, %v80, %v87
    %97 = vset.pattern.permute.xlu0 0
    %98 = vperm.xlu0 %97, %v42
    %v99 = vpop.permute.xlu0 %98
    %vm101 = vcmask 97280
    %v103 = vsel %vm101, %v41, 0
    %v105 = vsel %vm77, %v76, 0
    %v107 = vsel %vm77, %v94, 0
    %109 = vmatprep.subr.mxu0 %v95
    %110 = vmatpush1.msra.mxu0 %v78
    %111 = vmatprep.subr.mxu0 %v107
    %112 = vmatpush1.msra.mxu0 %v105
    %113 = vmatprep.subr.mxu0 0.0
    %114 = vmatpush1.msra.mxu0 0.0
    %115 = vmatprep.subr.mxu0 0.0
    %116 = vmatpush1.msra.mxu0 0.0
    %117 = vmatprep.subr.mxu0 0.0
    %118 = vmatpush1.msra.mxu0 0.0
    %119 = vmatprep.subr.mxu0 0.0
    %120 = vmatpush1.msra.mxu0 0.0
    %121 = vmatprep.subr.mxu0 0.0
    %122 = vmatpush1.msra.mxu0 0.0
    %123 = vmatprep.subr.mxu0 0.0
    %124 = vmatpush1.msra.mxu0 0.0
    %125 = vmatprep.subr.mxu0 0.0
    %126 = vmatpush1.msra.mxu0 0.0
    %127 = vmatprep.subr.mxu0 0.0
    %128 = vmatpush1.msra.mxu0 0.0
    %129 = vmatprep.subr.mxu0 0.0
    %130 = vmatpush1.msra.mxu0 0.0
    %131 = vmatprep.subr.mxu0 0.0
    %132 = vmatpush1.msra.mxu0 0.0
    %133 = vmatprep.subr.mxu0 0.0
    %134 = vmatpush1.msra.mxu0 0.0
    %135 = vmatprep.subr.mxu0 0.0
    %136 = vmatpush1.msra.mxu0 0.0
    %137 = vmatprep.subr.mxu0 0.0
    %138 = vmatpush1.msra.mxu0 0.0
    %139 = vmatprep.subr.mxu0 0.0
    %140 = vmatpush1.msra.mxu0 0.0
    %141 = vmatprep.subr.mxu0 0.0
    %142 = vmatpush1.msra.mxu0 0.0
    %143 = vmatprep.subr.mxu0 0.0
    %144 = vmatpush1.msra.mxu0 0.0
    %145 = vmatprep.subr.mxu0 0.0
    %146 = vmatpush1.msra.mxu0 0.0
    %147 = vmatprep.subr.mxu0 0.0
    %148 = vmatpush1.msra.mxu0 0.0
    %149 = vmatprep.subr.mxu0 0.0
    %150 = vmatpush1.msra.mxu0 0.0
    %151 = vmatprep.subr.mxu0 0.0
    %152 = vmatpush1.msra.mxu0 0.0
    %153 = vmatprep.subr.mxu0 0.0
    %154 = vmatpush1.msra.mxu0 0.0
    %155 = vmatprep.subr.mxu0 0.0
    %156 = vmatpush1.msra.mxu0 0.0
    %157 = vmatprep.subr.mxu0 0.0
    %158 = vmatpush1.msra.mxu0 0.0
    %159 = vmatprep.subr.mxu0 0.0
    %160 = vmatpush1.msra.mxu0 0.0
    %161 = vmatprep.subr.mxu0 0.0
    %162 = vmatpush1.msra.mxu0 0.0
    %163 = vmatprep.subr.mxu0 0.0
    %164 = vmatpush1.msra.mxu0 0.0
    %165 = vmatprep.subr.mxu0 0.0
    %166 = vmatpush1.msra.mxu0 0.0
    %167 = vmatprep.subr.mxu0 0.0
    %168 = vmatpush1.msra.mxu0 0.0
    %169 = vmatprep.subr.mxu0 0.0
    %170 = vmatpush1.msra.mxu0 0.0
    %171 = vmatprep.subr.mxu0 0.0
    %172 = vmatpush1.msra.mxu0 0.0
    %173 = vmatprep.mubr.f32.mxu0 0.0
    %174 = vmatmul.mubr.f32.gmra.mrb[0].mxu0 %v103
    %v175 = vpop.f32.mrb[0].mxu0
    %v176 = vadd.f32 %v99, %v175
    %v177 = vpop.f32.mrb[0].mxu0
    %v178 = vadd.f32 %v99, %v177
    %179 = vdwg.mxu0
    %vm180 = vcmp.ge.f32.partialorder %v176, 0.0
    %vm181 = vcmp.ge.f32.partialorder %v178, 0.0
    %v182 = vmul.f32 %v176, 0.1
    %v183 = vmul.f32 %v178, 0.1
    %v184 = vsel %vm180, %v176, %v182
    %v185 = vsel %vm181, %v178, %v183
    %v187 = vlaneseq
    %v188 = vshrl.u32 %v187, 7
    %v189 = vsub.s32 0, %v188
    %v190 = vrot.slane %v59, %v189
    %192 = vmatprep.subr.mxu0 0.0
    %193 = vmatpush1.msra.mxu0 %v43
    %194 = vmatprep.subr.mxu0 0.0
    %195 = vmatpush1.msra.mxu0 %v44
    %196 = vmatprep.subr.mxu0 0.0
    %197 = vmatpush1.msra.mxu0 %v45
    %198 = vmatprep.subr.mxu0 0.0
    %199 = vmatpush1.msra.mxu0 %v46
    %200 = vmatprep.subr.mxu0 0.0
    %201 = vmatpush1.msra.mxu0 %v47
    %202 = vmatprep.subr.mxu0 0.0
    %203 = vmatpush1.msra.mxu0 %v48
    %204 = vmatprep.subr.mxu0 0.0
    %205 = vmatpush1.msra.mxu0 %v49
    %206 = vmatprep.subr.mxu0 0.0
    %207 = vmatpush1.msra.mxu0 %v50
    %208 = vmatprep.subr.mxu0 0.0
    %209 = vmatpush1.msra.mxu0 %v51
    %210 = vmatprep.subr.mxu0 0.0
    %211 = vmatpush1.msra.mxu0 %v52
    %212 = vmatprep.subr.mxu0 0.0
    %213 = vmatpush1.msra.mxu0 %v53
    %214 = vmatprep.subr.mxu0 0.0
    %215 = vmatpush1.msra.mxu0 %v54
    %216 = vmatprep.subr.mxu0 0.0
    %217 = vmatpush1.msra.mxu0 %v55
    %218 = vmatprep.subr.mxu0 0.0
    %219 = vmatpush1.msra.mxu0 %v56
    %220 = vmatprep.subr.mxu0 0.0
    %221 = vmatpush1.msra.mxu0 %v57
    %222 = vmatprep.subr.mxu0 0.0
    %223 = vmatpush1.msra.mxu0 %v58
    %224 = vmatprep.subr.mxu0 0.0
    %225 = vmatpush1.msra.mxu0 0.0
    %226 = vmatprep.subr.mxu0 0.0
    %227 = vmatpush1.msra.mxu0 0.0
    %228 = vmatprep.subr.mxu0 0.0
    %229 = vmatpush1.msra.mxu0 0.0
    %230 = vmatprep.subr.mxu0 0.0
    %231 = vmatpush1.msra.mxu0 0.0
    %232 = vmatprep.subr.mxu0 0.0
    %233 = vmatpush1.msra.mxu0 0.0
    %234 = vmatprep.subr.mxu0 0.0
    %235 = vmatpush1.msra.mxu0 0.0
    %236 = vmatprep.subr.mxu0 0.0
    %237 = vmatpush1.msra.mxu0 0.0
    %238 = vmatprep.subr.mxu0 0.0
    %239 = vmatpush1.msra.mxu0 0.0
    %240 = vmatprep.subr.mxu0 0.0
    %241 = vmatpush1.msra.mxu0 0.0
    %242 = vmatprep.subr.mxu0 0.0
    %243 = vmatpush1.msra.mxu0 0.0
    %244 = vmatprep.subr.mxu0 0.0
    %245 = vmatpush1.msra.mxu0 0.0
    %246 = vmatprep.subr.mxu0 0.0
    %247 = vmatpush1.msra.mxu0 0.0
    %248 = vmatprep.subr.mxu0 0.0
    %249 = vmatpush1.msra.mxu0 0.0
    %250 = vmatprep.subr.mxu0 0.0
    %251 = vmatpush1.msra.mxu0 0.0
    %252 = vmatprep.subr.mxu0 0.0
    %253 = vmatpush1.msra.mxu0 0.0
    %254 = vmatprep.subr.mxu0 0.0
    %255 = vmatpush1.msra.mxu0 0.0
    %256 = vmatprep.mubr.f32.mxu0 0.0
    %257 = vmatmul.mubr.f32.gmra.mrb[0].mxu0 %v184
    %v258 = vpop.f32.mrb[0].mxu0
    %v259 = vadd.f32 %v190, %v258
    %v260 = vpop.f32.mrb[0].mxu0
    %261 = vmatprep.mubr.f32.mxu0 0.0
    %262 = vmatmul.mubr.f32.gmra.mrb[0].mxu0 %v185
    %v263 = vpop.f32.mrb[0].mxu0
    %v264 = vadd.f32 %v190, %v263
    %v265 = vpop.f32.mrb[0].mxu0
    %266 = vdwg.mxu0
    %vm267 = vcmp.ge.f32.partialorder %v259, 0.0
    %vm268 = vcmp.ge.f32.partialorder %v264, 0.0
    %v269 = vmul.f32 %v259, 0.1
    %v270 = vmul.f32 %v264, 0.1
    %v271 = vsel %vm267, %v259, %v269
    %v272 = vsel %vm268, %v264, %v270
    %273 = vst [vmem:[#allocation5] sm:$0xff] %v271
    %s274 = scalar_lea.vmem [#allocation5], 8
    %275 = vst [vmem:[%s274] sm:$0xff] %v272
    %v276 = vlaneseq
    %v277 = vand.u32 %v276, 127
    %vm278 = vcmp.lt.s32.totalorder %v277, 14
    %v279 = vld [vmem:[#allocation5] sm:$0xff]
    %v280 = vsel %vm278, %v279, 0.0
    %281 = vadd.xlane.f32.xlu0 %v280
    %v282 = vpop.xlane.xlu0 %281
    %v283 = vadd.f32 %v282, 0.0
    %v284 = vld [vmem:[%s274] sm:$0xff]
    %v285 = vsel %vm278, %v284, 0.0
    %286 = vadd.xlane.f32.xlu0 %v285
    %v287 = vpop.xlane.xlu0 %286
    %v288 = vadd.f32 %v283, %v287
    %v289 = vrcp.pop 28.0
    %v290 = vmul.f32 %v288, %v289
    %v291 = vsub.f32 %v279, %v290
    %v292 = vsel %vm278, %v291, 0.0
    %v293 = vmul.f32 %v292, %v292
    %294 = vadd.xlane.f32.xlu0 %v293
    %v295 = vpop.xlane.xlu0 %294
    %v296 = vadd.f32 %v295, 0.0
    %v297 = vsub.f32 %v284, %v290
    %v298 = vsel %vm278, %v297, 0.0
    %v299 = vmul.f32 %v298, %v298
    %300 = vadd.xlane.f32.xlu0 %v299
    %v301 = vpop.xlane.xlu0 %300
    %v302 = vadd.f32 %v296, %v301
    %v303 = vmul.f32 %v302, %v289
    %v304 = vadd.f32 %v303, 1e-05
    %v305 = vrsqrt.pop %v304
    %v306 = vld [vmem:[%s5] sm:$0xff]
    %v307 = vmul.f32 %v306, %v305
    %v308 = vld [vmem:[%s6] sm:$0xff]
    %v309 = vmul.f32 %v307, %v290
    %v310 = vsub.f32 %v308, %v309
    %312 = vset.pattern.permute.xlu0 0
    %313 = vperm.xlu0 %312, %v307
    %v314 = vpop.permute.xlu0 %313
    %v316 = vmul.f32 %v279, %v314
    %318 = vset.pattern.permute.xlu0 0
    %319 = vperm.xlu0 %318, %v310
    %v320 = vpop.permute.xlu0 %319
    %v322 = vadd.f32 %v316, %v320
    %323 = vst [vmem:[#allocation5] sm:$0xff] %v322
    %v324 = vld [vmem:[%s274] sm:$0xff]
    %v325 = vmul.f32 %v324, %v314
    %v326 = vadd.f32 %v325, %v320
    %327 = vst [vmem:[%s274] sm:$0xff] %v326
    // Predicated region
    $region34: #{tpu_custom_call.1} parent=1 // pred_check
      _
    $region35: #{tpu_custom_call.1} parent=1 // pred_check_branch
      %329 = sbr.rel (0) target = $region37
    $region36: #{tpu_custom_call.1} parent=1 // pred_region
      %s331 = ssub.s32 256, 256
      %332 = vsyncadd [#allocation4], %s331
      %s333 = sshll.u32 [#allocation5], 4
      %s334 = int_to_ptr.vmem [resolvable:$true] %s333
      %339 = dma.vmem_to_hbm [thread:$0]  %s334, 256, %s7, [#allocation4], 128, 128, 8
    $region37: #{tpu_custom_call.1} parent=1 // pred_fallthru
      _
    // Predicated region
    $region38: #{tpu_custom_call.1} parent=1 // pred_check
      _
    $region39: #{tpu_custom_call.1} parent=1 // pred_check_branch
      %341 = sbr.rel (0) target = $region41
    $region40: #{tpu_custom_call.1} parent=1 // pred_region
      %342 = dma.done [#allocation4], 256
    $region41: #{tpu_custom_call.1} parent=1 // pred_fallthru
      _
    %343 = vsyncpa [#allocation3], 1
    %344 = vsyncpa [#allocation4], 1

</llo_original>
